<compile_context>
chip_gen: v6e
topology: v6e:2x2x1
jax: 0.10.0
libtpu: 0.0.40
codegen_flags: <defaults>
</compile_context>

<pallas_src>
import functools

import jax
import jax.numpy as jnp
from jax.experimental import pallas as pl
from jax.experimental.pallas import tpu as pltpu

EPS = 1e-5           # PyTorch BatchNorm1d default eps
NEG_SLOPE = 0.2      # leakyrelu_negative_slope


def _round_up(n, m):
    return ((n + m - 1) // m) * m


def _tpu_generation():
    """Best-effort TPU generation sniff (falls back to 6)."""
    try:
        kind = jax.devices()[0].device_kind.lower()
    except Exception:
        return 6
    for g in (7, 6, 5, 4):
        if f"v{g}" in kind:
            return g
    return 6


def _leaky_relu(x, slope=NEG_SLOPE):
    return jnp.where(x >= 0, x, jnp.asarray(slope, x.dtype) * x)


def mlp_kernel(x_ref, s1_ref, t1_ref, w1_ref, b1_ref, w2_ref, b2_ref, o_ref,
               *, ew_dtype):
    # BN1 folded to a single FMA; bf16 VPU path on v6e/v7x, f32 on v5e.
    h = x_ref[...].astype(ew_dtype) * s1_ref[...] + t1_ref[...]
    h = _leaky_relu(h)

    # Linear1 with BN2 pre-folded (block-diagonal, lane-packed). MXU, f32 acc.
    h = jnp.dot(h.astype(jnp.bfloat16), w1_ref[...],
                preferred_element_type=jnp.float32) + b1_ref[...]
    h = _leaky_relu(h)

    # Linear2 (block-diagonal, lane-packed). MXU, f32 acc.
    out = jnp.dot(h.astype(jnp.bfloat16), w2_ref[...],
                  preferred_element_type=jnp.float32) + b2_ref[...]
    o_ref[...] = out.astype(o_ref.dtype)


def prepare_params(p, *, pack=None, ew_dtype=None):
    """Offline (once per parameter set) BN folding + lane packing.

    * BN1 folded into (scale1, shift1); BN2 folded into W1'/b1'.
    * `pack` independent batch rows share one vector row: x (B, Cin) is
      reshaped to (B/P, P*Cin) in the wrapper, and the weights are replicated
      block-diagonally so the 32/64/16-wide feature axes fill the 128-lane
      vregs and the output store is lane-dense.
    """
    gen = _tpu_generation()
    if pack is None:
        # K = pack*Cin matches the MXU width (128 on v5e, 256 on v6e/v7x)
        # and keeps the added block-diagonal FLOPs under the HBM time/row.
        pack = 4 if gen <= 5 else 8
    if ew_dtype is None:
        # v5e has no bf16 VPU path; v6e/v7x do.
        ew_dtype = jnp.float32 if gen <= 5 else jnp.bfloat16

    scale1 = p["bn1_gamma"] * jax.lax.rsqrt(p["bn1_var"] + EPS)
    shift1 = p["bn1_beta"] - p["bn1_mean"] * scale1

    scale2 = p["bn2_gamma"] * jax.lax.rsqrt(p["bn2_var"] + EPS)
    w1_fold = p["w1"] * scale2[None, :]
    b1_fold = (p["b1"] - p["bn2_mean"]) * scale2 + p["bn2_beta"]

    eye = jnp.eye(pack, dtype=jnp.float32)
    blk = lambda w: jnp.kron(eye, w)                    # block-diag replicate
    tile = lambda v: jnp.tile(v, pack).reshape(1, -1)   # per-lane vectors

    return {
        "pack": pack,
        "ew_dtype": ew_dtype,
        "scale1": tile(scale1).astype(ew_dtype),        # (1, P*Cin)
        "shift1": tile(shift1).astype(ew_dtype),        # (1, P*Cin)
        "w1": blk(w1_fold).astype(jnp.bfloat16),        # (P*Cin, P*Cmid) BN2-folded
        "b1": tile(b1_fold).astype(jnp.float32),        # (1, P*Cmid)    BN2-folded
        "w2": blk(p["w2"]).astype(jnp.bfloat16),        # (P*Cmid, P*Cout)
        "b2": tile(p["b2"]).astype(jnp.float32),        # (1, P*Cout)
    }


def mlp_forward(x, fp, *, tb=8192):
    """x: (B, Cin) float. fp: dict from prepare_params(). Returns (B, Cout) f32."""
    P = fp["pack"]
    B, Cin = x.shape
    Cin_p = fp["scale1"].shape[1]
    Cmid_p = fp["w1"].shape[1]
    Cout_p = fp["w2"].shape[1]
    Cout = Cout_p // P
    assert Cin_p == P * Cin

    # ---- packed-row tiling ------------------------------------------------
    rows_needed = -(-B // P)                            # ceil(B / P)
    # Big batch tiles: per-grid-step overhead (~0.35us) dwarfs the HBM time a
    # small tile moves; VMEM is nowhere near binding even on v7x (double
    # buffers ~2 MiB at tb=8192, weights ~0.4 MiB).
    tr = max(16, min(_round_up(max(tb // P, 16), 16),
                     _round_up(rows_needed, 16)))
    # Keep >=2 grid steps when the batch allows so ("parallel",) can shard the
    # batch axis across v7x's two TensorCores (no-op on single-TC v5e/v6e).
    if rows_needed > 16 and tr >= rows_needed:
        tr = max(16, _round_up(-(-rows_needed // 2), 16))
    rows = _round_up(rows_needed, tr)
    b_pad = rows * P
    grid = (rows // tr,)

    # bf16 activations in HBM (halves input bytes); padded rows are sliced off.
    xb = x.astype(jnp.bfloat16)
    if b_pad != B:
        xb = jnp.pad(xb, ((0, b_pad - B), (0, 0)))
    x_packed = xb.reshape(rows, Cin_p)                  # contiguous, free reshape

    x_spec = pl.BlockSpec((tr, Cin_p), lambda i: (i, 0))
    s1_spec = pl.BlockSpec((1, Cin_p), lambda i: (0, 0))
    t1_spec = pl.BlockSpec((1, Cin_p), lambda i: (0, 0))
    w1_spec = pl.BlockSpec((Cin_p, Cmid_p), lambda i: (0, 0))
    b1_spec = pl.BlockSpec((1, Cmid_p), lambda i: (0, 0))
    w2_spec = pl.BlockSpec((Cmid_p, Cout_p), lambda i: (0, 0))
    b2_spec = pl.BlockSpec((1, Cout_p), lambda i: (0, 0))
    out_spec = pl.BlockSpec((tr, Cout_p), lambda i: (i, 0))

    kernel = functools.partial(mlp_kernel, ew_dtype=fp["ew_dtype"])
    out = pl.pallas_call(
        kernel,
        out_shape=jax.ShapeDtypeStruct((rows, Cout_p), jnp.float32),
        grid=grid,
        in_specs=[x_spec, s1_spec, t1_spec, w1_spec, b1_spec, w2_spec, b2_spec],
        out_specs=out_spec,
        compiler_params=pltpu.CompilerParams(
            dimension_semantics=("parallel",)),
    )(x_packed, fp["scale1"], fp["shift1"], fp["w1"], fp["b1"],
      fp["w2"], fp["b2"])

    return out.reshape(b_pad, Cout)[:B]


def init_params(key, in_channels, mid_channels, out_channels):
    """Deterministic init mirroring PyTorch defaults (+ non-trivial BN stats)."""
    keys = jax.random.split(key, 12)
    (k1, k2, k3, k4, k5, k6, k7, k8, k9, k10, k11, k12) = keys
    lim1 = 1.0 / jnp.sqrt(in_channels)
    lim2 = 1.0 / jnp.sqrt(mid_channels)
    return {
        "bn1_gamma": 1.0 + 0.1 * jax.random.normal(k5, (in_channels,), jnp.float32),
        "bn1_beta": 0.1 * jax.random.normal(k6, (in_channels,), jnp.float32),
        "bn1_mean": 0.1 * jax.random.normal(k7, (in_channels,), jnp.float32),
        "bn1_var": jax.random.uniform(k8, (in_channels,), jnp.float32, 0.5, 1.5),
        # weights stored as (in, out) = W.T relative to PyTorch's (out, in)
        "w1": jax.random.uniform(k1, (in_channels, mid_channels), jnp.float32,
                                 -lim1, lim1),
        "b1": jax.random.uniform(k2, (mid_channels,), jnp.float32, -lim1, lim1),
        "bn2_gamma": 1.0 + 0.1 * jax.random.normal(k9, (mid_channels,), jnp.float32),
        "bn2_beta": 0.1 * jax.random.normal(k10, (mid_channels,), jnp.float32),
        "bn2_mean": 0.1 * jax.random.normal(k11, (mid_channels,), jnp.float32),
        "bn2_var": jax.random.uniform(k12, (mid_channels,), jnp.float32, 0.5, 1.5),
        "w2": jax.random.uniform(k3, (mid_channels, out_channels), jnp.float32,
                                 -lim2, lim2),
        "b2": jax.random.uniform(k4, (out_channels,), jnp.float32, -lim2, lim2),
    }


def mlp_reference(x, p):
    """Pure-JAX f32 reference of the original (unfolded) forward pass."""
    h = (x - p["bn1_mean"]) / jnp.sqrt(p["bn1_var"] + EPS) * p["bn1_gamma"] + p["bn1_beta"]
    h = jnp.where(h >= 0, h, NEG_SLOPE * h)
    h = h @ p["w1"] + p["b1"]
    h = (h - p["bn2_mean"]) / jnp.sqrt(p["bn2_var"] + EPS) * p["bn2_gamma"] + p["bn2_beta"]
    h = jnp.where(h >= 0, h, NEG_SLOPE * h)
    return h @ p["w2"] + p["b2"]


if __name__ == "__main__":
    key = jax.random.PRNGKey(0)
    kx, kp = jax.random.split(key)

    B, Cin, Cmid, Cout = 256, 32, 64, 16
    x = jax.random.normal(kx, (B, Cin), jnp.float32)
    params = init_params(kp, Cin, Cmid, Cout)
    folded = prepare_params(params)

    out = mlp_forward(x, folded)           # 2 batch tiles (>=2 steps for v7x)
    out = jax.block_until_ready(out)

    ref = mlp_reference(x, params)
    assert out.shape == (B, Cout)
    # bf16 activations + bf16 matmul operands (f32 accumulate) -> relaxed tol.
    assert jnp.allclose(out, ref, atol=2e-2, rtol=2e-2), "mismatch vs reference"

    print("KERNEL_OK")
</pallas_src>

<mosaic_0001>
module attributes {stable_mosaic.version = 11 : i64} {
  func.func @mlp_kernel(%arg0: i32, %arg1: memref<16x256xbf16, #tpu.memory_space<vmem>>, %arg2: memref<1x256xbf16, #tpu.memory_space<vmem>>, %arg3: memref<1x256xbf16, #tpu.memory_space<vmem>>, %arg4: memref<256x512xbf16, #tpu.memory_space<vmem>>, %arg5: memref<1x512xf32, #tpu.memory_space<vmem>>, %arg6: memref<512x128xbf16, #tpu.memory_space<vmem>>, %arg7: memref<1x128xf32, #tpu.memory_space<vmem>>, %arg8: memref<16x128xf32, #tpu.memory_space<vmem>>) attributes {dimension_semantics = [#tpu.dimension_semantics<parallel>], iteration_bounds = array<i64: 2>, scalar_prefetch = 0 : i64, scratch_operands = 0 : i64, tpu.core_type = #tpu.core_type<tc>, window_params = [{transform_indices = @transform_0, window_bounds = array<i64: 16, 256>}, {pipeline_mode = #tpu.pipeline_mode<synchronous>, transform_indices = @transform_1, window_bounds = array<i64: 1, 256>}, {pipeline_mode = #tpu.pipeline_mode<synchronous>, transform_indices = @transform_2, window_bounds = array<i64: 1, 256>}, {pipeline_mode = #tpu.pipeline_mode<synchronous>, transform_indices = @transform_3, window_bounds = array<i64: 256, 512>}, {pipeline_mode = #tpu.pipeline_mode<synchronous>, transform_indices = @transform_4, window_bounds = array<i64: 1, 512>}, {pipeline_mode = #tpu.pipeline_mode<synchronous>, transform_indices = @transform_5, window_bounds = array<i64: 512, 128>}, {pipeline_mode = #tpu.pipeline_mode<synchronous>, transform_indices = @transform_6, window_bounds = array<i64: 1, 128>}, {transform_indices = @transform_7, window_bounds = array<i64: 16, 128>}]} {
    %c0 = arith.constant 0 : index
    %c0_0 = arith.constant 0 : index
    %0 = vector.load %arg1[%c0, %c0_0] : memref<16x256xbf16, #tpu.memory_space<vmem>>, vector<16x256xbf16>
    %c0_1 = arith.constant 0 : index
    %c0_2 = arith.constant 0 : index
    %1 = vector.load %arg2[%c0_1, %c0_2] : memref<1x256xbf16, #tpu.memory_space<vmem>>, vector<1x256xbf16>
    %2 = vector.broadcast %1 : vector<1x256xbf16> to vector<16x256xbf16>
    %3 = arith.mulf %0, %2 : vector<16x256xbf16>
    %c0_3 = arith.constant 0 : index
    %c0_4 = arith.constant 0 : index
    %4 = vector.load %arg3[%c0_3, %c0_4] : memref<1x256xbf16, #tpu.memory_space<vmem>>, vector<1x256xbf16>
    %5 = vector.broadcast %4 : vector<1x256xbf16> to vector<16x256xbf16>
    %6 = arith.addf %3, %5 : vector<16x256xbf16>
    %cst = arith.constant 0.000000e+00 : bf16
    %7 = vector.broadcast %cst : bf16 to vector<16x256xbf16>
    %8 = arith.cmpf oge, %6, %7 : vector<16x256xbf16>
    %cst_5 = arith.constant 2.001950e-01 : bf16
    %9 = vector.broadcast %cst_5 : bf16 to vector<16x256xbf16>
    %10 = arith.mulf %9, %6 : vector<16x256xbf16>
    %11 = arith.select %8, %6, %10 : vector<16x256xi1>, vector<16x256xbf16>
    %c0_6 = arith.constant 0 : index
    %c0_7 = arith.constant 0 : index
    %12 = vector.load %arg4[%c0_6, %c0_7] : memref<256x512xbf16, #tpu.memory_space<vmem>>, vector<256x512xbf16>
    %cst_8 = arith.constant dense<0.000000e+00> : vector<16x512xf32>
    %13 = tpu.matmul %11, %12, %cst_8 {dimension_numbers = #tpu.dot_dimension_numbers<[1], [0], [0], [1], [0, 0, 1, 1], [], []>} : vector<16x256xbf16>, vector<256x512xbf16>, vector<16x512xf32> -> vector<16x512xf32>
    %c0_9 = arith.constant 0 : index
    %c0_10 = arith.constant 0 : index
    %14 = vector.load %arg5[%c0_9, %c0_10] : memref<1x512xf32, #tpu.memory_space<vmem>>, vector<1x512xf32>
    %15 = vector.broadcast %14 : vector<1x512xf32> to vector<16x512xf32>
    %16 = arith.addf %13, %15 : vector<16x512xf32>
    %cst_11 = arith.constant 0.000000e+00 : f32
    %17 = vector.broadcast %cst_11 : f32 to vector<16x512xf32>
    %18 = arith.cmpf oge, %16, %17 : vector<16x512xf32>
    %cst_12 = arith.constant 2.000000e-01 : f32
    %19 = vector.broadcast %cst_12 : f32 to vector<16x512xf32>
    %20 = arith.mulf %19, %16 : vector<16x512xf32>
    %21 = arith.select %18, %16, %20 : vector<16x512xi1>, vector<16x512xf32>
    %22 = arith.truncf %21 : vector<16x512xf32> to vector<16x512xbf16>
    %c0_13 = arith.constant 0 : index
    %c0_14 = arith.constant 0 : index
    %23 = vector.load %arg6[%c0_13, %c0_14] : memref<512x128xbf16, #tpu.memory_space<vmem>>, vector<512x128xbf16>
    %cst_15 = arith.constant dense<0.000000e+00> : vector<16x128xf32>
    %24 = tpu.matmul %22, %23, %cst_15 {dimension_numbers = #tpu.dot_dimension_numbers<[1], [0], [0], [1], [0, 0, 1, 1], [], []>} : vector<16x512xbf16>, vector<512x128xbf16>, vector<16x128xf32> -> vector<16x128xf32>
    %c0_16 = arith.constant 0 : index
    %c0_17 = arith.constant 0 : index
    %25 = vector.load %arg7[%c0_16, %c0_17] : memref<1x128xf32, #tpu.memory_space<vmem>>, vector<1x128xf32>
    %26 = vector.broadcast %25 : vector<1x128xf32> to vector<16x128xf32>
    %27 = arith.addf %24, %26 : vector<16x128xf32>
    %c0_18 = arith.constant 0 : index
    %c0_19 = arith.constant 0 : index
    %28 = vector.load %arg8[%c0_18, %c0_19] : memref<16x128xf32, #tpu.memory_space<vmem>>, vector<16x128xf32>
    tpu.vector_store %arg8[%c0_18, %c0_19], %27 {strides = array<i32>} : memref<16x128xf32, #tpu.memory_space<vmem>>, vector<16x128xf32>,
    return
  }
  func.func @transform_0(%arg0: i32) -> (i32, i32) {
    %c0_i32 = arith.constant 0 : i32
    %c0_i32_0 = arith.constant 0 : i32
    return %arg0, %c0_i32 : i32, i32
  }
  func.func @transform_1(%arg0: i32) -> (i32, i32) {
    %c0_i32 = arith.constant 0 : i32
    %c0_i32_0 = arith.constant 0 : i32
    %c0_i32_1 = arith.constant 0 : i32
    return %c0_i32, %c0_i32_0 : i32, i32
  }
  func.func @transform_2(%arg0: i32) -> (i32, i32) {
    %c0_i32 = arith.constant 0 : i32
    %c0_i32_0 = arith.constant 0 : i32
    %c0_i32_1 = arith.constant 0 : i32
    return %c0_i32, %c0_i32_0 : i32, i32
  }
  func.func @transform_3(%arg0: i32) -> (i32, i32) {
    %c0_i32 = arith.constant 0 : i32
    %c0_i32_0 = arith.constant 0 : i32
    %c0_i32_1 = arith.constant 0 : i32
    return %c0_i32, %c0_i32_0 : i32, i32
  }
  func.func @transform_4(%arg0: i32) -> (i32, i32) {
    %c0_i32 = arith.constant 0 : i32
    %c0_i32_0 = arith.constant 0 : i32
    %c0_i32_1 = arith.constant 0 : i32
    return %c0_i32, %c0_i32_0 : i32, i32
  }
  func.func @transform_5(%arg0: i32) -> (i32, i32) {
    %c0_i32 = arith.constant 0 : i32
    %c0_i32_0 = arith.constant 0 : i32
    %c0_i32_1 = arith.constant 0 : i32
    return %c0_i32, %c0_i32_0 : i32, i32
  }
  func.func @transform_6(%arg0: i32) -> (i32, i32) {
    %c0_i32 = arith.constant 0 : i32
    %c0_i32_0 = arith.constant 0 : i32
    %c0_i32_1 = arith.constant 0 : i32
    return %c0_i32, %c0_i32_0 : i32, i32
  }
  func.func @transform_7(%arg0: i32) -> (i32, i32) {
    %c0_i32 = arith.constant 0 : i32
    %c0_i32_0 = arith.constant 0 : i32
    return %arg0, %c0_i32 : i32, i32
  }
}

</mosaic_0001>

<llo_original>
// kernel: tpu_custom_call.1
$region0: #{tpu_custom_call.1}
  #allocation0 [shape = 'u32[]', space=smem, size = 0x4, offset = 0x4, fixed_abs, tag = 'smem constant byte address 0x4 - core index']
  #allocation1 [shape = 'u32[144,128]{1,0:T(1,128)}', space=vmem, size = 0x12000, scoped, tag = 'internal scratch']
  %s0 = inlined_call_operand.hbm [shape: bf16[32,256], index: 0, kind: input, shape index: {}]
  %s1 = inlined_call_operand.hbm [shape: bf16[1,256], index: 1, kind: input, shape index: {}]
  %s2 = inlined_call_operand.vmem [shape: bf16[1,256], index: 2, kind: input, shape index: {}]
  %s3 = inlined_call_operand.hbm [shape: bf16[256,512], index: 3, kind: input, shape index: {}]
  %s4 = inlined_call_operand.vmem [shape: f32[1,512], index: 4, kind: input, shape index: {}]
  %s5 = inlined_call_operand.hbm [shape: bf16[512,128], index: 5, kind: input, shape index: {}]
  %s6 = inlined_call_operand.vmem [shape: f32[1,128], index: 6, kind: input, shape index: {}]
  %s7 = inlined_call_operand.hbm [shape: f32[32,128], index: 7, kind: output, shape index: {}]
  %s8 = sld [smem:[#allocation0]]
  $region77: #{tpu_custom_call.1} parent=0
    _
  %s10 = ssub.s32 1, %s8
  %s11 = scalar_select 0, %s10, %s8
  $region1: #{tpu_custom_call.1} parent=0
    #allocation2 [shape = 'u8[16384]{0}', space=vmem, size = 0x4000, scoped, tag = 'input window, operand 0']
    #allocation3 [shape = 's32[2]{0}', space=sflag, size = 0x8, scoped, tag = 'scoped memory for tpu_custom_call.1']
    #allocation4 [shape = 's32[2]{0}', space=sflag, size = 0x8, scoped, tag = 'scoped memory for tpu_custom_call.1']
    #allocation5 [shape = 'u8[1024]{0}', space=vmem, size = 0x400, scoped, tag = 'input window, operand 1, single buffered']
    #allocation6 [shape = 's32[1]{0}', space=sflag, size = 0x4, scoped, tag = 'scoped memory for tpu_custom_call.1']
    #allocation7 [shape = 'u8[262144]{0}', space=vmem, size = 0x40000, scoped, tag = 'input window, operand 3, single buffered']
    #allocation8 [shape = 'u8[131072]{0}', space=vmem, size = 0x20000, scoped, tag = 'input window, operand 5, single buffered']
    #allocation9 [shape = 's32[1]{0}', space=sflag, size = 0x4, scoped, tag = 'scoped memory for tpu_custom_call.1']
    #allocation10 [shape = 'u8[16384]{0}', space=vmem, size = 0x4000, scoped, tag = 'output window, operand 0']
    %12 = vsyncpa [#allocation3], 0
    %s13 = scalar_lea.sflag [#allocation3], 1
    %14 = vsyncpa %s13, 0
    %15 = vsyncpa [#allocation6], 0
    %16 = vsyncpa [#allocation9], 0
    %17 = vsyncpa [#allocation4], 0
    %s18 = scalar_lea.sflag [#allocation4], 1
    %19 = vsyncpa %s18, 0
    loop: start=0, step=1, limit=4
    $region2: #{tpu_custom_call.1} parent=1 // loop_pre_header
      _
    $region3: #{tpu_custom_call.1} parent=1 // loop_header
      %s21 = sphi 0, %s25
      %p22 = scmp.ge.s32.totalorder %s21, 4
      %s31 = sphi 0, %s33
      %s34 = sphi 0, %s31
      %s35 = sphi 0, %s34
      %s51 = sphi 0, %s35
      %s55 = sphi 0, %s55
      %s57 = sphi 0, %s55
      %s58 = sphi 0, %s57
      %s72 = sphi 0, %s58
      %s76 = sphi 0, %s76
      %s78 = sphi 0, %s76
      %s79 = sphi 0, %s78
      %s93 = sphi 0, %s79
      %s97 = sphi 0, %s97
      %s99 = sphi 0, %s97
      %s100 = sphi 0, %s99
      %s114 = sphi 0, %s100
      %s118 = sphi 0, %s118
      %s120 = sphi 0, %s118
      %s121 = sphi 0, %s120
      %s135 = sphi 0, %s121
      %s139 = sphi 0, %s139
      %s141 = sphi 0, %s139
      %s142 = sphi 0, %s141
      %s156 = sphi 0, %s142
      %s160 = sphi 0, %s160
      %s162 = sphi 0, %s160
      %s163 = sphi 0, %s162
      %s177 = sphi 0, %s163
      %s183 = sphi 0, %s185
      %s186 = sphi 0, %s183
      %s187 = sphi 0, %s186
      %s203 = sphi 0, %s187
    $region4: #{tpu_custom_call.1} parent=1 // loop_header_branch
      %24 = sbr.rel (%p22) target = $region8
    $region5: #{tpu_custom_call.1} parent=1 // loop_body
      %s26 = ssub.s32 %s21, 1
      %s27 = ssub.s32 %s21, 2
      %s28 = sadd.s32 %s21, 1
      %s29 = ssub.s32 %s21, %s28
      %p30 = scmp.eq.s32.totalorder %s29, 0
      %s32 = sadd.s32 %s31, 1
      %s33 = scalar_select %p30, %s31, %s32
      %p36 = pneg %p30
      %p37 = scmp.eq.s32.totalorder %s21, 1
      %p38 = por %p36, %p37
      %p39 = scmp.ne.s32.totalorder %s31, %s34
      %p40 = scmp.eq.s32.totalorder %s21, 0
      %p41 = por %p39, %p40
      %p42 = scmp.ne.s32.totalorder %s31, %s34
      %p43 = scmp.eq.s32.totalorder %s26, 1
      %p44 = por %p42, %p43
      %p45 = scmp.ne.s32.totalorder %s34, %s35
      %p46 = scmp.eq.s32.totalorder %s26, 0
      %p47 = por %p45, %p46
      %p48 = scmp.ne.s32.totalorder %s34, %s35
      %p49 = scmp.eq.s32.totalorder %s27, 1
      %p50 = por %p48, %p49
      %p52 = scmp.ne.s32.totalorder %s35, %s51
      %p53 = scmp.eq.s32.totalorder %s27, 0
      %p54 = por %p52, %p53
      %s56 = sadd.s32 %s55, 1
      %p59 = scmp.eq.s32.totalorder %s21, 1
      %p60 = scmp.ne.s32.totalorder %s55, %s57
      %p61 = scmp.eq.s32.totalorder %s21, 0
      %p62 = por %p60, %p61
      %p63 = scmp.ne.s32.totalorder %s55, %s57
      %p64 = scmp.eq.s32.totalorder %s26, 1
      %p65 = por %p63, %p64
      %p66 = scmp.ne.s32.totalorder %s57, %s58
      %p67 = scmp.eq.s32.totalorder %s26, 0
      %p68 = por %p66, %p67
      %p69 = scmp.ne.s32.totalorder %s57, %s58
      %p70 = scmp.eq.s32.totalorder %s27, 1
      %p71 = por %p69, %p70
      %p73 = scmp.ne.s32.totalorder %s58, %s72
      %p74 = scmp.eq.s32.totalorder %s27, 0
      %p75 = por %p73, %p74
      %s77 = sadd.s32 %s76, 1
      %p80 = scmp.eq.s32.totalorder %s21, 1
      %p81 = scmp.ne.s32.totalorder %s76, %s78
      %p82 = scmp.eq.s32.totalorder %s21, 0
      %p83 = por %p81, %p82
      %p84 = scmp.ne.s32.totalorder %s76, %s78
      %p85 = scmp.eq.s32.totalorder %s26, 1
      %p86 = por %p84, %p85
      %p87 = scmp.ne.s32.totalorder %s78, %s79
      %p88 = scmp.eq.s32.totalorder %s26, 0
      %p89 = por %p87, %p88
      %p90 = scmp.ne.s32.totalorder %s78, %s79
      %p91 = scmp.eq.s32.totalorder %s27, 1
      %p92 = por %p90, %p91
      %p94 = scmp.ne.s32.totalorder %s79, %s93
      %p95 = scmp.eq.s32.totalorder %s27, 0
      %p96 = por %p94, %p95
      %s98 = sadd.s32 %s97, 1
      %p101 = scmp.eq.s32.totalorder %s21, 1
      %p102 = scmp.ne.s32.totalorder %s97, %s99
      %p103 = scmp.eq.s32.totalorder %s21, 0
      %p104 = por %p102, %p103
      %p105 = scmp.ne.s32.totalorder %s97, %s99
      %p106 = scmp.eq.s32.totalorder %s26, 1
      %p107 = por %p105, %p106
      %p108 = scmp.ne.s32.totalorder %s99, %s100
      %p109 = scmp.eq.s32.totalorder %s26, 0
      %p110 = por %p108, %p109
      %p111 = scmp.ne.s32.totalorder %s99, %s100
      %p112 = scmp.eq.s32.totalorder %s27, 1
      %p113 = por %p111, %p112
      %p115 = scmp.ne.s32.totalorder %s100, %s114
      %p116 = scmp.eq.s32.totalorder %s27, 0
      %p117 = por %p115, %p116
      %s119 = sadd.s32 %s118, 1
      %p122 = scmp.eq.s32.totalorder %s21, 1
      %p123 = scmp.ne.s32.totalorder %s118, %s120
      %p124 = scmp.eq.s32.totalorder %s21, 0
      %p125 = por %p123, %p124
      %p126 = scmp.ne.s32.totalorder %s118, %s120
      %p127 = scmp.eq.s32.totalorder %s26, 1
      %p128 = por %p126, %p127
      %p129 = scmp.ne.s32.totalorder %s120, %s121
      %p130 = scmp.eq.s32.totalorder %s26, 0
      %p131 = por %p129, %p130
      %p132 = scmp.ne.s32.totalorder %s120, %s121
      %p133 = scmp.eq.s32.totalorder %s27, 1
      %p134 = por %p132, %p133
      %p136 = scmp.ne.s32.totalorder %s121, %s135
      %p137 = scmp.eq.s32.totalorder %s27, 0
      %p138 = por %p136, %p137
      %s140 = sadd.s32 %s139, 1
      %p143 = scmp.eq.s32.totalorder %s21, 1
      %p144 = scmp.ne.s32.totalorder %s139, %s141
      %p145 = scmp.eq.s32.totalorder %s21, 0
      %p146 = por %p144, %p145
      %p147 = scmp.ne.s32.totalorder %s139, %s141
      %p148 = scmp.eq.s32.totalorder %s26, 1
      %p149 = por %p147, %p148
      %p150 = scmp.ne.s32.totalorder %s141, %s142
      %p151 = scmp.eq.s32.totalorder %s26, 0
      %p152 = por %p150, %p151
      %p153 = scmp.ne.s32.totalorder %s141, %s142
      %p154 = scmp.eq.s32.totalorder %s27, 1
      %p155 = por %p153, %p154
      %p157 = scmp.ne.s32.totalorder %s142, %s156
      %p158 = scmp.eq.s32.totalorder %s27, 0
      %p159 = por %p157, %p158
      %s161 = sadd.s32 %s160, 1
      %p164 = scmp.eq.s32.totalorder %s21, 1
      %p165 = scmp.ne.s32.totalorder %s160, %s162
      %p166 = scmp.eq.s32.totalorder %s21, 0
      %p167 = por %p165, %p166
      %p168 = scmp.ne.s32.totalorder %s160, %s162
      %p169 = scmp.eq.s32.totalorder %s26, 1
      %p170 = por %p168, %p169
      %p171 = scmp.ne.s32.totalorder %s162, %s163
      %p172 = scmp.eq.s32.totalorder %s26, 0
      %p173 = por %p171, %p172
      %p174 = scmp.ne.s32.totalorder %s162, %s163
      %p175 = scmp.eq.s32.totalorder %s27, 1
      %p176 = por %p174, %p175
      %p178 = scmp.ne.s32.totalorder %s163, %s177
      %p179 = scmp.eq.s32.totalorder %s27, 0
      %p180 = por %p178, %p179
      %s181 = ssub.s32 %s21, %s28
      %p182 = scmp.eq.s32.totalorder %s181, 0
      %s184 = sadd.s32 %s183, 1
      %s185 = scalar_select %p182, %s183, %s184
      %p188 = pneg %p182
      %p189 = scmp.eq.s32.totalorder %s21, 1
      %p190 = por %p188, %p189
      %p191 = scmp.ne.s32.totalorder %s183, %s186
      %p192 = scmp.eq.s32.totalorder %s21, 0
      %p193 = por %p191, %p192
      %p194 = scmp.ne.s32.totalorder %s183, %s186
      %p195 = scmp.eq.s32.totalorder %s26, 1
      %p196 = por %p194, %p195
      %p197 = scmp.ne.s32.totalorder %s186, %s187
      %p198 = scmp.eq.s32.totalorder %s26, 0
      %p199 = por %p197, %p198
      %p200 = scmp.ne.s32.totalorder %s186, %s187
      %p201 = scmp.eq.s32.totalorder %s27, 1
      %p202 = por %p200, %p201
      %p204 = scmp.ne.s32.totalorder %s187, %s203
      %p205 = scmp.eq.s32.totalorder %s27, 0
      %p206 = por %p204, %p205
      %p207 = scmp.le.s32.totalorder 1, %s21
      %p208 = scmp.lt.s32.totalorder %s21, 3
      %p209 = pnand %p207, %p208
      %p210 = pneg %p209
      // Predicated region
      $region9: #{tpu_custom_call.1} parent=5 // pred_check
        _
      $region10: #{tpu_custom_call.1} parent=5 // pred_check_branch
        %212 = sbr.rel (%p209) target = $region12
      $region11: #{tpu_custom_call.1} parent=5 // pred_region
        %s213 = ssub.s32 %s21, 1
        // Predicated region
        $region13: #{tpu_custom_call.1} parent=11 // pred_check
          %p214 = pneg %p68
        $region14: #{tpu_custom_call.1} parent=11 // pred_check_branch
          %216 = sbr.rel (%p214) target = $region16
        $region15: #{tpu_custom_call.1} parent=11 // pred_region
          %s218 = ssub.s32 32, 32
          %219 = vsyncadd [#allocation6], %s218
          %s221 = sshll.u32 [#allocation5], 4
          %s222 = int_to_ptr.vmem [resolvable:$true] %s221
          %224 = dma.hbm_to_vmem [thread:$0]  %s1, 32, %s222, [#allocation6]
        $region16: #{tpu_custom_call.1} parent=11 // pred_fallthru
          _
        // Predicated region
        $region17: #{tpu_custom_call.1} parent=11 // pred_check
          %p225 = pneg %p89
        $region18: #{tpu_custom_call.1} parent=11 // pred_check_branch
          %227 = sbr.rel (%p225) target = $region20
        $region19: #{tpu_custom_call.1} parent=11 // pred_region
          _
        $region20: #{tpu_custom_call.1} parent=11 // pred_fallthru
          _
        // Predicated region
        $region21: #{tpu_custom_call.1} parent=11 // pred_check
          %p228 = pneg %p110
        $region22: #{tpu_custom_call.1} parent=11 // pred_check_branch
          %230 = sbr.rel (%p228) target = $region24
        $region23: #{tpu_custom_call.1} parent=11 // pred_region
          %s232 = ssub.s32 8192, 8192
          %233 = vsyncadd [#allocation6], %s232
          %s234 = sshll.u32 [#allocation7], 4
          %s235 = int_to_ptr.vmem [resolvable:$true] %s234
          %240 = dma.hbm_to_vmem [thread:$0]  %s3, 8192, %s235, [#allocation6], 256, 256, 16
        $region24: #{tpu_custom_call.1} parent=11 // pred_fallthru
          _
        // Predicated region
        $region25: #{tpu_custom_call.1} parent=11 // pred_check
          %p241 = pneg %p131
        $region26: #{tpu_custom_call.1} parent=11 // pred_check_branch
          %243 = sbr.rel (%p241) target = $region28
        $region27: #{tpu_custom_call.1} parent=11 // pred_region
          _
        $region28: #{tpu_custom_call.1} parent=11 // pred_fallthru
          _
        // Predicated region
        $region29: #{tpu_custom_call.1} parent=11 // pred_check
          %p244 = pneg %p152
        $region30: #{tpu_custom_call.1} parent=11 // pred_check_branch
          %246 = sbr.rel (%p244) target = $region32
        $region31: #{tpu_custom_call.1} parent=11 // pred_region
          %s248 = ssub.s32 4096, 4096
          %249 = vsyncadd [#allocation9], %s248
          %s250 = sshll.u32 [#allocation8], 4
          %s251 = int_to_ptr.vmem [resolvable:$true] %s250
          %256 = dma.hbm_to_vmem [thread:$0]  %s5, 4096, %s251, [#allocation9], 64, 64, 4
        $region32: #{tpu_custom_call.1} parent=11 // pred_fallthru
          _
        // Predicated region
        $region33: #{tpu_custom_call.1} parent=11 // pred_check
          %p257 = pneg %p173
        $region34: #{tpu_custom_call.1} parent=11 // pred_check_branch
          %259 = sbr.rel (%p257) target = $region36
        $region35: #{tpu_custom_call.1} parent=11 // pred_region
          _
        $region36: #{tpu_custom_call.1} parent=11 // pred_fallthru
          _
      $region12: #{tpu_custom_call.1} parent=5 // pred_fallthru
        _
      %p260 = scmp.lt.s32.totalorder %s21, 2
      // Predicated region
      $region37: #{tpu_custom_call.1} parent=5 // pred_check
        %p261 = pneg %p260
      $region38: #{tpu_custom_call.1} parent=5 // pred_check_branch
        %263 = sbr.rel (%p261) target = $region40
      $region39: #{tpu_custom_call.1} parent=5 // pred_region
        // Predicated region
        $region41: #{tpu_custom_call.1} parent=39 // pred_check
          %p264 = pneg %p41
        $region42: #{tpu_custom_call.1} parent=39 // pred_check_branch
          %266 = sbr.rel (%p264) target = $region44
        $region43: #{tpu_custom_call.1} parent=39 // pred_region
          %s267 = sand.u32 %s31, 1
          %s268 = scalar_lea.sflag [#allocation3], %s267
          %s269 = sand.u32 %s31, 1
          %s270 = smul.addr %s269, 16
          %s271 = scalar_lea.vmem [#allocation2], %s270
          %s272 = smul.u32 2, %s21
          %s274 = ssub.s32 256, 256
          %275 = vsyncadd %s268, %s274
          %s276 = smul.addr %s272, 2
          %s277 = smul.addr %s276, 64
          %s278 = scalar_lea.hbm %s0, %s277
          %s279 = sshll.u32 %s271, 4
          %s280 = int_to_ptr.vmem [resolvable:$true] %s279
          %285 = dma.hbm_to_vmem [thread:$0]  %s278, 256, %s280, %s268, 128, 128, 8
        $region44: #{tpu_custom_call.1} parent=39 // pred_fallthru
          _
      $region40: #{tpu_custom_call.1} parent=5 // pred_fallthru
        _
      %p286 = scmp.le.s32.totalorder 1, %s21
      %p287 = scmp.lt.s32.totalorder %s21, 3
      %p288 = pnand %p286, %p287
      %p289 = pneg %p288
      // Predicated region
      $region45: #{tpu_custom_call.1} parent=5 // pred_check
        _
      $region46: #{tpu_custom_call.1} parent=5 // pred_check_branch
        %291 = sbr.rel (%p288) target = $region48
      $region47: #{tpu_custom_call.1} parent=5 // pred_region
        %s292 = ssub.s32 %s21, 1
        %s293 = sand.u32 %s34, 1
        %s294 = scalar_lea.sflag [#allocation3], %s293
        %s295 = sand.u32 %s34, 1
        %s296 = smul.addr %s295, 16
        %s297 = scalar_lea.vmem [#allocation2], %s296
        // Predicated region
        $region49: #{tpu_custom_call.1} parent=47 // pred_check
          %p298 = pneg %p47
        $region50: #{tpu_custom_call.1} parent=47 // pred_check_branch
          %300 = sbr.rel (%p298) target = $region52
        $region51: #{tpu_custom_call.1} parent=47 // pred_region
          %301 = dma.done %s294, 256
        $region52: #{tpu_custom_call.1} parent=47 // pred_fallthru
          _
        // Predicated region
        $region53: #{tpu_custom_call.1} parent=47 // pred_check
          %p302 = pneg %p68
        $region54: #{tpu_custom_call.1} parent=47 // pred_check_branch
          %304 = sbr.rel (%p302) target = $region56
        $region55: #{tpu_custom_call.1} parent=47 // pred_region
          %305 = dma.done [#allocation6], 32
        $region56: #{tpu_custom_call.1} parent=47 // pred_fallthru
          _
        // Predicated region
        $region57: #{tpu_custom_call.1} parent=47 // pred_check
          %p306 = pneg %p110
        $region58: #{tpu_custom_call.1} parent=47 // pred_check_branch
          %308 = sbr.rel (%p306) target = $region60
        $region59: #{tpu_custom_call.1} parent=47 // pred_region
          %309 = dma.done [#allocation6], 8192
        $region60: #{tpu_custom_call.1} parent=47 // pred_fallthru
          _
        // Predicated region
        $region61: #{tpu_custom_call.1} parent=47 // pred_check
          %p310 = pneg %p152
        $region62: #{tpu_custom_call.1} parent=47 // pred_check_branch
          %312 = sbr.rel (%p310) target = $region64
        $region63: #{tpu_custom_call.1} parent=47 // pred_region
          %313 = dma.done [#allocation9], 4096
        $region64: #{tpu_custom_call.1} parent=47 // pred_fallthru
          _
        %s314 = sand.u32 %s34, 1
        %s315 = scalar_lea.sflag [#allocation3], %s314
        %s316 = sand.u32 %s34, 1
        %s317 = smul.addr %s316, 16
        %s318 = scalar_lea.vmem [#allocation2], %s317
        %p319 = pneg %p47
        %p320 = pneg %p44
        %p321 = pneg %p68
        %p322 = pneg %p65
        %p323 = pneg %p89
        %p324 = pneg %p86
        %p325 = pneg %p110
        %p326 = pneg %p107
        %p327 = pneg %p131
        %p328 = pneg %p128
        %p329 = pneg %p152
        %p330 = pneg %p149
        %p331 = pneg %p173
        %p332 = pneg %p170
        %p333 = pneg %p199
        %p334 = pneg %p196
        %s335 = sand.u32 %s186, 1
        %s336 = scalar_lea.sflag [#allocation4], %s335
        %s337 = sand.u32 %s186, 1
        %s338 = smul.addr %s337, 16
        %s339 = scalar_lea.vmem [#allocation10], %s338
        %s340 = smul.u32 2, %s26
        %s341 = smul.u32 2, %s26
        %v344 = vld [vmem:[%s297] sm:$0xff]
        %v345 = vld [vmem:[%s297 + $0x8] sm:$0xff]
        %v346 = vld [vmem:[#allocation5] sm:$0x3]
        %v349 = vunpack.c.l.s4 1966171168
        %v350 = vunpack.c.0.s8 %v349
        %v351 = vlaneseq
        %v352 = vshrl.u32 %v351, 7
        %v353 = vsub.s32 %v350, %v352
        %v354 = vrot.slane %v346, %v353
        %v355 = vcombine.high %v354, %v354
        %v357 = vunpack.c.l.s4 1966171168
        %v358 = vunpack.c.0.s8 %v357
        %v359 = vlaneseq
        %v360 = vshrl.u32 %v359, 7
        %v361 = vsub.s32 %v358, %v360
        %v362 = vrot.slane %v354, %v361
        %v364 = vunpack.c.l.s4 1966171168
        %v365 = vunpack.c.0.s8 %v364
        %v366 = vlaneseq
        %v367 = vshrl.u32 %v366, 7
        %v368 = vsub.s32 %v365, %v367
        %v369 = vrot.slane %v355, %v368
        %v371 = vpack.i.b16 %v362, %v362
        %v373 = vlaneseq
        %v374 = vshrl.u32 %v373, 7
        %v375 = vsub.s32 0, %v374
        %v376 = vrot.slane %v371, %v375
        %v378 = vpack.i.b16 %v369, %v369
        %v380 = vlaneseq
        %v381 = vshrl.u32 %v380, 7
        %v382 = vsub.s32 0, %v381
        %v383 = vrot.slane %v378, %v382
        %v386 = vunpack.c.l.b16 %v376
        %v387 = vunpack.c.l.b16 %v383
        %v388 = vpack.c.b16 %v387, %v386
        %v390 = vmul.bf16 %v344, %v388
        %v391 = vmul.bf16 %v345, %v388
        %v392 = vld [vmem:[%s2] sm:$0x3]
        %v395 = vunpack.c.l.s4 1966171168
        %v396 = vunpack.c.0.s8 %v395
        %v397 = vlaneseq
        %v398 = vshrl.u32 %v397, 7
        %v399 = vsub.s32 %v396, %v398
        %v400 = vrot.slane %v392, %v399
        %v401 = vcombine.high %v400, %v400
        %v403 = vunpack.c.l.s4 1966171168
        %v404 = vunpack.c.0.s8 %v403
        %v405 = vlaneseq
        %v406 = vshrl.u32 %v405, 7
        %v407 = vsub.s32 %v404, %v406
        %v408 = vrot.slane %v400, %v407
        %v410 = vunpack.c.l.s4 1966171168
        %v411 = vunpack.c.0.s8 %v410
        %v412 = vlaneseq
        %v413 = vshrl.u32 %v412, 7
        %v414 = vsub.s32 %v411, %v413
        %v415 = vrot.slane %v401, %v414
        %v417 = vpack.i.b16 %v408, %v408
        %v419 = vlaneseq
        %v420 = vshrl.u32 %v419, 7
        %v421 = vsub.s32 0, %v420
        %v422 = vrot.slane %v417, %v421
        %v424 = vpack.i.b16 %v415, %v415
        %v426 = vlaneseq
        %v427 = vshrl.u32 %v426, 7
        %v428 = vsub.s32 0, %v427
        %v429 = vrot.slane %v424, %v428
        %v432 = vunpack.c.l.b16 %v422
        %v433 = vunpack.c.l.b16 %v429
        %v434 = vpack.c.b16 %v433, %v432
        %v436 = vadd.bf16 %v390, %v434
        %v437 = vadd.bf16 %v391, %v434
        %vm438 = vcmp.ge.bf16.partialorder %v436, 0
        %vm439 = vcmp.ge.bf16.partialorder %v437, 0
        %v440 = vmul.bf16 %v436, 1045249613
        %v441 = vmul.bf16 %v437, 1045249613
        %v442 = vsel %vm438, %v436, %v440
        %v443 = vsel %vm439, %v437, %v441
        %v444 = vld [vmem:[#allocation7] sm:$0xff]
        %v445 = vld [vmem:[#allocation7 + $0x8] sm:$0xff]
        %v446 = vld [vmem:[#allocation7 + $0x10] sm:$0xff]
        %v447 = vld [vmem:[#allocation7 + $0x18] sm:$0xff]
        %v448 = vld [vmem:[#allocation7 + $0x20] sm:$0xff]
        %v449 = vld [vmem:[#allocation7 + $0x28] sm:$0xff]
        %v450 = vld [vmem:[#allocation7 + $0x30] sm:$0xff]
        %v451 = vld [vmem:[#allocation7 + $0x38] sm:$0xff]
        %v452 = vld [vmem:[#allocation7 + $0x40] sm:$0xff]
        %v453 = vld [vmem:[#allocation7 + $0x48] sm:$0xff]
        %v454 = vld [vmem:[#allocation7 + $0x50] sm:$0xff]
        %v455 = vld [vmem:[#allocation7 + $0x58] sm:$0xff]
        %v456 = vld [vmem:[#allocation7 + $0x60] sm:$0xff]
        %v457 = vld [vmem:[#allocation7 + $0x68] sm:$0xff]
        %v458 = vld [vmem:[#allocation7 + $0x70] sm:$0xff]
        %v459 = vld [vmem:[#allocation7 + $0x78] sm:$0xff]
        %v460 = vld [vmem:[#allocation7 + $0x80] sm:$0xff]
        %v461 = vld [vmem:[#allocation7 + $0x88] sm:$0xff]
        %v462 = vld [vmem:[#allocation7 + $0x90] sm:$0xff]
        %v463 = vld [vmem:[#allocation7 + $0x98] sm:$0xff]
        %v464 = vld [vmem:[#allocation7 + $0xa0] sm:$0xff]
        %v465 = vld [vmem:[#allocation7 + $0xa8] sm:$0xff]
        %v466 = vld [vmem:[#allocation7 + $0xb0] sm:$0xff]
        %v467 = vld [vmem:[#allocation7 + $0xb8] sm:$0xff]
        %v468 = vld [vmem:[#allocation7 + $0xc0] sm:$0xff]
        %v469 = vld [vmem:[#allocation7 + $0xc8] sm:$0xff]
        %v470 = vld [vmem:[#allocation7 + $0xd0] sm:$0xff]
        %v471 = vld [vmem:[#allocation7 + $0xd8] sm:$0xff]
        %v472 = vld [vmem:[#allocation7 + $0xe0] sm:$0xff]
        %v473 = vld [vmem:[#allocation7 + $0xe8] sm:$0xff]
        %v474 = vld [vmem:[#allocation7 + $0xf0] sm:$0xff]
        %v475 = vld [vmem:[#allocation7 + $0xf8] sm:$0xff]
        %v476 = vld [vmem:[#allocation7 + $0x100] sm:$0xff]
        %v477 = vld [vmem:[#allocation7 + $0x108] sm:$0xff]
        %v478 = vld [vmem:[#allocation7 + $0x110] sm:$0xff]
        %v479 = vld [vmem:[#allocation7 + $0x118] sm:$0xff]
        %v480 = vld [vmem:[#allocation7 + $0x120] sm:$0xff]
        %v481 = vld [vmem:[#allocation7 + $0x128] sm:$0xff]
        %v482 = vld [vmem:[#allocation7 + $0x130] sm:$0xff]
        %v483 = vld [vmem:[#allocation7 + $0x138] sm:$0xff]
        %v484 = vld [vmem:[#allocation7 + $0x140] sm:$0xff]
        %v485 = vld [vmem:[#allocation7 + $0x148] sm:$0xff]
        %v486 = vld [vmem:[#allocation7 + $0x150] sm:$0xff]
        %v487 = vld [vmem:[#allocation7 + $0x158] sm:$0xff]
        %v488 = vld [vmem:[#allocation7 + $0x160] sm:$0xff]
        %v489 = vld [vmem:[#allocation7 + $0x168] sm:$0xff]
        %v490 = vld [vmem:[#allocation7 + $0x170] sm:$0xff]
        %v491 = vld [vmem:[#allocation7 + $0x178] sm:$0xff]
        %v492 = vld [vmem:[#allocation7 + $0x180] sm:$0xff]
        %v493 = vld [vmem:[#allocation7 + $0x188] sm:$0xff]
        %v494 = vld [vmem:[#allocation7 + $0x190] sm:$0xff]
        %v495 = vld [vmem:[#allocation7 + $0x198] sm:$0xff]
        %v496 = vld [vmem:[#allocation7 + $0x1a0] sm:$0xff]
        %v497 = vld [vmem:[#allocation7 + $0x1a8] sm:$0xff]
        %v498 = vld [vmem:[#allocation7 + $0x1b0] sm:$0xff]
        %v499 = vld [vmem:[#allocation7 + $0x1b8] sm:$0xff]
        %v500 = vld [vmem:[#allocation7 + $0x1c0] sm:$0xff]
        %v501 = vld [vmem:[#allocation7 + $0x1c8] sm:$0xff]
        %v502 = vld [vmem:[#allocation7 + $0x1d0] sm:$0xff]
        %v503 = vld [vmem:[#allocation7 + $0x1d8] sm:$0xff]
        %v504 = vld [vmem:[#allocation7 + $0x1e0] sm:$0xff]
        %v505 = vld [vmem:[#allocation7 + $0x1e8] sm:$0xff]
        %v506 = vld [vmem:[#allocation7 + $0x1f0] sm:$0xff]
        %v507 = vld [vmem:[#allocation7 + $0x1f8] sm:$0xff]
        %v508 = vld [vmem:[%s4] sm:$0xf]
        %v510 = vlaneseq
        %v511 = vshrl.u32 %v510, 7
        %v512 = vsub.s32 0, %v511
        %v513 = vrot.slane %v508, %v512
        %v514 = vlaneseq
        %v515 = vshrl.u32 %v514, 7
        %v516 = vsub.s32 1, %v515
        %v517 = vrot.slane %v508, %v516
        %v518 = vlaneseq
        %v519 = vshrl.u32 %v518, 7
        %v520 = vsub.s32 2, %v519
        %v521 = vrot.slane %v508, %v520
        %v522 = vlaneseq
        %v523 = vshrl.u32 %v522, 7
        %v524 = vsub.s32 3, %v523
        %v525 = vrot.slane %v508, %v524
        %v532 = vunpack.c.l.b16 %v442
        %v533 = vunpack.c.h.b16 %v442
        %v534 = vunpack.c.l.b16 %v443
        %v535 = vunpack.c.h.b16 %v443
        %v536 = vpack.c.b16 %v534, %v532
        %v537 = vpack.c.b16 %v535, %v533
        %v604 = vunpack.c.l.b16 %v444
        %v605 = vunpack.c.h.b16 %v444
        %v606 = vunpack.c.l.b16 %v445
        %v607 = vunpack.c.h.b16 %v445
        %v608 = vunpack.c.l.b16 %v446
        %v609 = vunpack.c.h.b16 %v446
        %v610 = vunpack.c.l.b16 %v447
        %v611 = vunpack.c.h.b16 %v447
        %v612 = vunpack.c.l.b16 %v448
        %v613 = vunpack.c.h.b16 %v448
        %v614 = vunpack.c.l.b16 %v449
        %v615 = vunpack.c.h.b16 %v449
        %v616 = vunpack.c.l.b16 %v450
        %v617 = vunpack.c.h.b16 %v450
        %v618 = vunpack.c.l.b16 %v451
        %v619 = vunpack.c.h.b16 %v451
        %v620 = vunpack.c.l.b16 %v452
        %v621 = vunpack.c.h.b16 %v452
        %v622 = vunpack.c.l.b16 %v453
        %v623 = vunpack.c.h.b16 %v453
        %v624 = vunpack.c.l.b16 %v454
        %v625 = vunpack.c.h.b16 %v454
        %v626 = vunpack.c.l.b16 %v455
        %v627 = vunpack.c.h.b16 %v455
        %v628 = vunpack.c.l.b16 %v456
        %v629 = vunpack.c.h.b16 %v456
        %v630 = vunpack.c.l.b16 %v457
        %v631 = vunpack.c.h.b16 %v457
        %v632 = vunpack.c.l.b16 %v458
        %v633 = vunpack.c.h.b16 %v458
        %v634 = vunpack.c.l.b16 %v459
        %v635 = vunpack.c.h.b16 %v459
        %v636 = vunpack.c.l.b16 %v460
        %v637 = vunpack.c.h.b16 %v460
        %v638 = vunpack.c.l.b16 %v461
        %v639 = vunpack.c.h.b16 %v461
        %v640 = vunpack.c.l.b16 %v462
        %v641 = vunpack.c.h.b16 %v462
        %v642 = vunpack.c.l.b16 %v463
        %v643 = vunpack.c.h.b16 %v463
        %v644 = vunpack.c.l.b16 %v464
        %v645 = vunpack.c.h.b16 %v464
        %v646 = vunpack.c.l.b16 %v465
        %v647 = vunpack.c.h.b16 %v465
        %v648 = vunpack.c.l.b16 %v466
        %v649 = vunpack.c.h.b16 %v466
        %v650 = vunpack.c.l.b16 %v467
        %v651 = vunpack.c.h.b16 %v467
        %v652 = vunpack.c.l.b16 %v468
        %v653 = vunpack.c.h.b16 %v468
        %v654 = vunpack.c.l.b16 %v469
        %v655 = vunpack.c.h.b16 %v469
        %v656 = vunpack.c.l.b16 %v470
        %v657 = vunpack.c.h.b16 %v470
        %v658 = vunpack.c.l.b16 %v471
        %v659 = vunpack.c.h.b16 %v471
        %v660 = vunpack.c.l.b16 %v472
        %v661 = vunpack.c.h.b16 %v472
        %v662 = vunpack.c.l.b16 %v473
        %v663 = vunpack.c.h.b16 %v473
        %v664 = vunpack.c.l.b16 %v474
        %v665 = vunpack.c.h.b16 %v474
        %v666 = vunpack.c.l.b16 %v475
        %v667 = vunpack.c.h.b16 %v475
        %v668 = vunpack.c.l.b16 %v476
        %v669 = vunpack.c.h.b16 %v476
        %v670 = vunpack.c.l.b16 %v477
        %v671 = vunpack.c.h.b16 %v477
        %v672 = vunpack.c.l.b16 %v478
        %v673 = vunpack.c.h.b16 %v478
        %v674 = vunpack.c.l.b16 %v479
        %v675 = vunpack.c.h.b16 %v479
        %v676 = vunpack.c.l.b16 %v480
        %v677 = vunpack.c.h.b16 %v480
        %v678 = vunpack.c.l.b16 %v481
        %v679 = vunpack.c.h.b16 %v481
        %v680 = vunpack.c.l.b16 %v482
        %v681 = vunpack.c.h.b16 %v482
        %v682 = vunpack.c.l.b16 %v483
        %v683 = vunpack.c.h.b16 %v483
        %v684 = vunpack.c.l.b16 %v484
        %v685 = vunpack.c.h.b16 %v484
        %v686 = vunpack.c.l.b16 %v485
        %v687 = vunpack.c.h.b16 %v485
        %v688 = vunpack.c.l.b16 %v486
        %v689 = vunpack.c.h.b16 %v486
        %v690 = vunpack.c.l.b16 %v487
        %v691 = vunpack.c.h.b16 %v487
        %v692 = vunpack.c.l.b16 %v488
        %v693 = vunpack.c.h.b16 %v488
        %v694 = vunpack.c.l.b16 %v489
        %v695 = vunpack.c.h.b16 %v489
        %v696 = vunpack.c.l.b16 %v490
        %v697 = vunpack.c.h.b16 %v490
        %v698 = vunpack.c.l.b16 %v491
        %v699 = vunpack.c.h.b16 %v491
        %v700 = vunpack.c.l.b16 %v492
        %v701 = vunpack.c.h.b16 %v492
        %v702 = vunpack.c.l.b16 %v493
        %v703 = vunpack.c.h.b16 %v493
        %v704 = vunpack.c.l.b16 %v494
        %v705 = vunpack.c.h.b16 %v494
        %v706 = vunpack.c.l.b16 %v495
        %v707 = vunpack.c.h.b16 %v495
        %v708 = vunpack.c.l.b16 %v496
        %v709 = vunpack.c.h.b16 %v496
        %v710 = vunpack.c.l.b16 %v497
        %v711 = vunpack.c.h.b16 %v497
        %v712 = vunpack.c.l.b16 %v498
        %v713 = vunpack.c.h.b16 %v498
        %v714 = vunpack.c.l.b16 %v499
        %v715 = vunpack.c.h.b16 %v499
        %v716 = vunpack.c.l.b16 %v500
        %v717 = vunpack.c.h.b16 %v500
        %v718 = vunpack.c.l.b16 %v501
        %v719 = vunpack.c.h.b16 %v501
        %v720 = vunpack.c.l.b16 %v502
        %v721 = vunpack.c.h.b16 %v502
        %v722 = vunpack.c.l.b16 %v503
        %v723 = vunpack.c.h.b16 %v503
        %v724 = vunpack.c.l.b16 %v504
        %v725 = vunpack.c.h.b16 %v504
        %v726 = vunpack.c.l.b16 %v505
        %v727 = vunpack.c.h.b16 %v505
        %v728 = vunpack.c.l.b16 %v506
        %v729 = vunpack.c.h.b16 %v506
        %v730 = vunpack.c.l.b16 %v507
        %v731 = vunpack.c.h.b16 %v507
        %v732 = vpack.c.b16 %v608, %v604
        %v733 = vpack.c.b16 %v609, %v605
        %v734 = vpack.c.b16 %v610, %v606
        %v735 = vpack.c.b16 %v611, %v607
        %v736 = vpack.c.b16 %v616, %v612
        %v737 = vpack.c.b16 %v617, %v613
        %v738 = vpack.c.b16 %v618, %v614
        %v739 = vpack.c.b16 %v619, %v615
        %v740 = vpack.c.b16 %v624, %v620
        %v741 = vpack.c.b16 %v625, %v621
        %v742 = vpack.c.b16 %v626, %v622
        %v743 = vpack.c.b16 %v627, %v623
        %v744 = vpack.c.b16 %v632, %v628
        %v745 = vpack.c.b16 %v633, %v629
        %v746 = vpack.c.b16 %v634, %v630
        %v747 = vpack.c.b16 %v635, %v631
        %v748 = vpack.c.b16 %v640, %v636
        %v749 = vpack.c.b16 %v641, %v637
        %v750 = vpack.c.b16 %v642, %v638
        %v751 = vpack.c.b16 %v643, %v639
        %v752 = vpack.c.b16 %v648, %v644
        %v753 = vpack.c.b16 %v649, %v645
        %v754 = vpack.c.b16 %v650, %v646
        %v755 = vpack.c.b16 %v651, %v647
        %v756 = vpack.c.b16 %v656, %v652
        %v757 = vpack.c.b16 %v657, %v653
        %v758 = vpack.c.b16 %v658, %v654
        %v759 = vpack.c.b16 %v659, %v655
        %v760 = vpack.c.b16 %v664, %v660
        %v761 = vpack.c.b16 %v665, %v661
        %v762 = vpack.c.b16 %v666, %v662
        %v763 = vpack.c.b16 %v667, %v663
        %v764 = vpack.c.b16 %v672, %v668
        %v765 = vpack.c.b16 %v673, %v669
        %v766 = vpack.c.b16 %v674, %v670
        %v767 = vpack.c.b16 %v675, %v671
        %v768 = vpack.c.b16 %v680, %v676
        %v769 = vpack.c.b16 %v681, %v677
        %v770 = vpack.c.b16 %v682, %v678
        %v771 = vpack.c.b16 %v683, %v679
        %v772 = vpack.c.b16 %v688, %v684
        %v773 = vpack.c.b16 %v689, %v685
        %v774 = vpack.c.b16 %v690, %v686
        %v775 = vpack.c.b16 %v691, %v687
        %v776 = vpack.c.b16 %v696, %v692
        %v777 = vpack.c.b16 %v697, %v693
        %v778 = vpack.c.b16 %v698, %v694
        %v779 = vpack.c.b16 %v699, %v695
        %v780 = vpack.c.b16 %v704, %v700
        %v781 = vpack.c.b16 %v705, %v701
        %v782 = vpack.c.b16 %v706, %v702
        %v783 = vpack.c.b16 %v707, %v703
        %v784 = vpack.c.b16 %v712, %v708
        %v785 = vpack.c.b16 %v713, %v709
        %v786 = vpack.c.b16 %v714, %v710
        %v787 = vpack.c.b16 %v715, %v711
        %v788 = vpack.c.b16 %v720, %v716
        %v789 = vpack.c.b16 %v721, %v717
        %v790 = vpack.c.b16 %v722, %v718
        %v791 = vpack.c.b16 %v723, %v719
        %v792 = vpack.c.b16 %v728, %v724
        %v793 = vpack.c.b16 %v729, %v725
        %v794 = vpack.c.b16 %v730, %v726
        %v795 = vpack.c.b16 %v731, %v727
        %860 = vmatprep.subr.bf16.mxu0 %v761
        %861 = vmatpush1.bf16.msra.mxu0 %v760
        %862 = vmatprep.subr.bf16.mxu0 %v757
        %863 = vmatpush1.bf16.msra.mxu0 %v756
        %864 = vmatprep.subr.bf16.mxu0 %v753
        %865 = vmatpush1.bf16.msra.mxu0 %v752
        %866 = vmatprep.subr.bf16.mxu0 %v749
        %867 = vmatpush1.bf16.msra.mxu0 %v748
        %868 = vmatprep.subr.bf16.mxu0 %v745
        %869 = vmatpush1.bf16.msra.mxu0 %v744
        %870 = vmatprep.subr.bf16.mxu0 %v741
        %871 = vmatpush1.bf16.msra.mxu0 %v740
        %872 = vmatprep.subr.bf16.mxu0 %v737
        %873 = vmatpush1.bf16.msra.mxu0 %v736
        %874 = vmatprep.subr.bf16.mxu0 %v733
        %875 = vmatpush1.bf16.msra.mxu0 %v732
        %876 = vmatprep.subr.bf16.mxu0 %v793
        %877 = vmatpush2.bf16.msra.mxu0 %v792
        %878 = vmatprep.subr.bf16.mxu0 %v789
        %879 = vmatpush2.bf16.msra.mxu0 %v788
        %880 = vmatprep.subr.bf16.mxu0 %v785
        %881 = vmatpush2.bf16.msra.mxu0 %v784
        %882 = vmatprep.subr.bf16.mxu0 %v781
        %883 = vmatpush2.bf16.msra.mxu0 %v780
        %884 = vmatprep.subr.bf16.mxu0 %v777
        %885 = vmatpush2.bf16.msra.mxu0 %v776
        %886 = vmatprep.subr.bf16.mxu0 %v773
        %887 = vmatpush2.bf16.msra.mxu0 %v772
        %888 = vmatprep.subr.bf16.mxu0 %v769
        %889 = vmatpush2.bf16.msra.mxu0 %v768
        %890 = vmatprep.subr.bf16.mxu0 %v765
        %891 = vmatpush2.bf16.msra.mxu0 %v764
        %892 = vmatprep.mubr.bf16.mxu0 %v537
        %893 = vmatmul.mubr.bf16.gmra.mxu0 %v536
        %v894 = vpop.f32.mrf.mxu0
        %v895 = vadd.f32 %v513, %v894
        %v896 = vpop.f32.mrf.mxu0
        %v897 = vadd.f32 %v517, %v896
        %v898 = vpop.f32.mrf.mxu0
        %v899 = vadd.f32 %v513, %v898
        %v900 = vpop.f32.mrf.mxu0
        %v901 = vadd.f32 %v517, %v900
        %902 = vdwg.mxu0
        %903 = vmatprep.subr.bf16.mxu0 %v763
        %904 = vmatpush1.bf16.msra.mxu0 %v762
        %905 = vmatprep.subr.bf16.mxu0 %v759
        %906 = vmatpush1.bf16.msra.mxu0 %v758
        %907 = vmatprep.subr.bf16.mxu0 %v755
        %908 = vmatpush1.bf16.msra.mxu0 %v754
        %909 = vmatprep.subr.bf16.mxu0 %v751
        %910 = vmatpush1.bf16.msra.mxu0 %v750
        %911 = vmatprep.subr.bf16.mxu0 %v747
        %912 = vmatpush1.bf16.msra.mxu0 %v746
        %913 = vmatprep.subr.bf16.mxu0 %v743
        %914 = vmatpush1.bf16.msra.mxu0 %v742
        %915 = vmatprep.subr.bf16.mxu0 %v739
        %916 = vmatpush1.bf16.msra.mxu0 %v738
        %917 = vmatprep.subr.bf16.mxu0 %v735
        %918 = vmatpush1.bf16.msra.mxu0 %v734
        %919 = vmatprep.subr.bf16.mxu0 %v795
        %920 = vmatpush2.bf16.msra.mxu0 %v794
        %921 = vmatprep.subr.bf16.mxu0 %v791
        %922 = vmatpush2.bf16.msra.mxu0 %v790
        %923 = vmatprep.subr.bf16.mxu0 %v787
        %924 = vmatpush2.bf16.msra.mxu0 %v786
        %925 = vmatprep.subr.bf16.mxu0 %v783
        %926 = vmatpush2.bf16.msra.mxu0 %v782
        %927 = vmatprep.subr.bf16.mxu0 %v779
        %928 = vmatpush2.bf16.msra.mxu0 %v778
        %929 = vmatprep.subr.bf16.mxu0 %v775
        %930 = vmatpush2.bf16.msra.mxu0 %v774
        %931 = vmatprep.subr.bf16.mxu0 %v771
        %932 = vmatpush2.bf16.msra.mxu0 %v770
        %933 = vmatprep.subr.bf16.mxu0 %v767
        %934 = vmatpush2.bf16.msra.mxu0 %v766
        %935 = vmatprep.mubr.bf16.mxu0 %v537
        %936 = vmatmul.mubr.bf16.gmra.mxu0 %v536
        %v937 = vpop.f32.mrf.mxu0
        %v938 = vadd.f32 %v521, %v937
        %v939 = vpop.f32.mrf.mxu0
        %v940 = vadd.f32 %v525, %v939
        %v941 = vpop.f32.mrf.mxu0
        %v942 = vadd.f32 %v521, %v941
        %v943 = vpop.f32.mrf.mxu0
        %v944 = vadd.f32 %v525, %v943
        %945 = vdwg.mxu0
        %vm946 = vcmp.ge.f32.partialorder %v895, 0.0
        %vm947 = vcmp.ge.f32.partialorder %v897, 0.0
        %vm948 = vcmp.ge.f32.partialorder %v938, 0.0
        %vm949 = vcmp.ge.f32.partialorder %v940, 0.0
        %vm950 = vcmp.ge.f32.partialorder %v899, 0.0
        %vm951 = vcmp.ge.f32.partialorder %v901, 0.0
        %vm952 = vcmp.ge.f32.partialorder %v942, 0.0
        %vm953 = vcmp.ge.f32.partialorder %v944, 0.0
        %v954 = vmul.f32 %v895, 0.2
        %v955 = vmul.f32 %v897, 0.2
        %v956 = vmul.f32 %v938, 0.2
        %v957 = vmul.f32 %v940, 0.2
        %v958 = vmul.f32 %v899, 0.2
        %v959 = vmul.f32 %v901, 0.2
        %v960 = vmul.f32 %v942, 0.2
        %v961 = vmul.f32 %v944, 0.2
        %v962 = vsel %vm946, %v895, %v954
        %v963 = vsel %vm947, %v897, %v955
        %v964 = vsel %vm948, %v938, %v956
        %v965 = vsel %vm949, %v940, %v957
        %v966 = vsel %vm950, %v899, %v958
        %v967 = vsel %vm951, %v901, %v959
        %v968 = vsel %vm952, %v942, %v960
        %v969 = vsel %vm953, %v944, %v961
        %v970 = vpack.c.bf16 %v966, %v962
        %v971 = vpack.c.bf16 %v967, %v963
        %v972 = vpack.c.bf16 %v968, %v964
        %v973 = vpack.c.bf16 %v969, %v965
        %v974 = vld [vmem:[#allocation8] sm:$0xf]
        %v975 = vld [vmem:[#allocation8 + $0x4] sm:$0xf]
        %v976 = vld [vmem:[#allocation8 + $0x8] sm:$0xf]
        %v977 = vld [vmem:[#allocation8 + $0xc] sm:$0xf]
        %v978 = vld [vmem:[#allocation8 + $0x10] sm:$0xf]
        %v979 = vld [vmem:[#allocation8 + $0x14] sm:$0xf]
        %v980 = vld [vmem:[#allocation8 + $0x18] sm:$0xf]
        %v981 = vld [vmem:[#allocation8 + $0x1c] sm:$0xf]
        %v982 = vld [vmem:[#allocation8 + $0x20] sm:$0xf]
        %v983 = vld [vmem:[#allocation8 + $0x24] sm:$0xf]
        %v984 = vld [vmem:[#allocation8 + $0x28] sm:$0xf]
        %v985 = vld [vmem:[#allocation8 + $0x2c] sm:$0xf]
        %v986 = vld [vmem:[#allocation8 + $0x30] sm:$0xf]
        %v987 = vld [vmem:[#allocation8 + $0x34] sm:$0xf]
        %v988 = vld [vmem:[#allocation8 + $0x38] sm:$0xf]
        %v989 = vld [vmem:[#allocation8 + $0x3c] sm:$0xf]
        %v990 = vld [vmem:[#allocation8 + $0x40] sm:$0xf]
        %v991 = vld [vmem:[#allocation8 + $0x44] sm:$0xf]
        %v992 = vld [vmem:[#allocation8 + $0x48] sm:$0xf]
        %v993 = vld [vmem:[#allocation8 + $0x4c] sm:$0xf]
        %v994 = vld [vmem:[#allocation8 + $0x50] sm:$0xf]
        %v995 = vld [vmem:[#allocation8 + $0x54] sm:$0xf]
        %v996 = vld [vmem:[#allocation8 + $0x58] sm:$0xf]
        %v997 = vld [vmem:[#allocation8 + $0x5c] sm:$0xf]
        %v998 = vld [vmem:[#allocation8 + $0x60] sm:$0xf]
        %v999 = vld [vmem:[#allocation8 + $0x64] sm:$0xf]
        %v1000 = vld [vmem:[#allocation8 + $0x68] sm:$0xf]
        %v1001 = vld [vmem:[#allocation8 + $0x6c] sm:$0xf]
        %v1002 = vld [vmem:[#allocation8 + $0x70] sm:$0xf]
        %v1003 = vld [vmem:[#allocation8 + $0x74] sm:$0xf]
        %v1004 = vld [vmem:[#allocation8 + $0x78] sm:$0xf]
        %v1005 = vld [vmem:[#allocation8 + $0x7c] sm:$0xf]
        %v1006 = vld [vmem:[#allocation8 + $0x80] sm:$0xf]
        %v1007 = vld [vmem:[#allocation8 + $0x84] sm:$0xf]
        %v1008 = vld [vmem:[#allocation8 + $0x88] sm:$0xf]
        %v1009 = vld [vmem:[#allocation8 + $0x8c] sm:$0xf]
        %v1010 = vld [vmem:[#allocation8 + $0x90] sm:$0xf]
        %v1011 = vld [vmem:[#allocation8 + $0x94] sm:$0xf]
        %v1012 = vld [vmem:[#allocation8 + $0x98] sm:$0xf]
        %v1013 = vld [vmem:[#allocation8 + $0x9c] sm:$0xf]
        %v1014 = vld [vmem:[#allocation8 + $0xa0] sm:$0xf]
        %v1015 = vld [vmem:[#allocation8 + $0xa4] sm:$0xf]
        %v1016 = vld [vmem:[#allocation8 + $0xa8] sm:$0xf]
        %v1017 = vld [vmem:[#allocation8 + $0xac] sm:$0xf]
        %v1018 = vld [vmem:[#allocation8 + $0xb0] sm:$0xf]
        %v1019 = vld [vmem:[#allocation8 + $0xb4] sm:$0xf]
        %v1020 = vld [vmem:[#allocation8 + $0xb8] sm:$0xf]
        %v1021 = vld [vmem:[#allocation8 + $0xbc] sm:$0xf]
        %v1022 = vld [vmem:[#allocation8 + $0xc0] sm:$0xf]
        %v1023 = vld [vmem:[#allocation8 + $0xc4] sm:$0xf]
        %v1024 = vld [vmem:[#allocation8 + $0xc8] sm:$0xf]
        %v1025 = vld [vmem:[#allocation8 + $0xcc] sm:$0xf]
        %v1026 = vld [vmem:[#allocation8 + $0xd0] sm:$0xf]
        %v1027 = vld [vmem:[#allocation8 + $0xd4] sm:$0xf]
        %v1028 = vld [vmem:[#allocation8 + $0xd8] sm:$0xf]
        %v1029 = vld [vmem:[#allocation8 + $0xdc] sm:$0xf]
        %v1030 = vld [vmem:[#allocation8 + $0xe0] sm:$0xf]
        %v1031 = vld [vmem:[#allocation8 + $0xe4] sm:$0xf]
        %v1032 = vld [vmem:[#allocation8 + $0xe8] sm:$0xf]
        %v1033 = vld [vmem:[#allocation8 + $0xec] sm:$0xf]
        %v1034 = vld [vmem:[#allocation8 + $0xf0] sm:$0xf]
        %v1035 = vld [vmem:[#allocation8 + $0xf4] sm:$0xf]
        %v1036 = vld [vmem:[#allocation8 + $0xf8] sm:$0xf]
        %v1037 = vld [vmem:[#allocation8 + $0xfc] sm:$0xf]
        %v1038 = vld [vmem:[%s6] sm:$0x1]
        %v1040 = vlaneseq
        %v1041 = vshrl.u32 %v1040, 7
        %v1042 = vsub.s32 0, %v1041
        %v1043 = vrot.slane %v1038, %v1042
        %v1109 = vunpack.c.l.b16 %v974
        %v1110 = vunpack.c.l.b16 %v975
        %v1111 = vunpack.c.l.b16 %v976
        %v1112 = vunpack.c.l.b16 %v977
        %v1113 = vunpack.c.l.b16 %v978
        %v1114 = vunpack.c.l.b16 %v979
        %v1115 = vunpack.c.l.b16 %v980
        %v1116 = vunpack.c.l.b16 %v981
        %v1117 = vunpack.c.l.b16 %v982
        %v1118 = vunpack.c.l.b16 %v983
        %v1119 = vunpack.c.l.b16 %v984
        %v1120 = vunpack.c.l.b16 %v985
        %v1121 = vunpack.c.l.b16 %v986
        %v1122 = vunpack.c.l.b16 %v987
        %v1123 = vunpack.c.l.b16 %v988
        %v1124 = vunpack.c.l.b16 %v989
        %v1125 = vunpack.c.l.b16 %v990
        %v1126 = vunpack.c.l.b16 %v991
        %v1127 = vunpack.c.l.b16 %v992
        %v1128 = vunpack.c.l.b16 %v993
        %v1129 = vunpack.c.l.b16 %v994
        %v1130 = vunpack.c.l.b16 %v995
        %v1131 = vunpack.c.l.b16 %v996
        %v1132 = vunpack.c.l.b16 %v997
        %v1133 = vunpack.c.l.b16 %v998
        %v1134 = vunpack.c.l.b16 %v999
        %v1135 = vunpack.c.l.b16 %v1000
        %v1136 = vunpack.c.l.b16 %v1001
        %v1137 = vunpack.c.l.b16 %v1002
        %v1138 = vunpack.c.l.b16 %v1003
        %v1139 = vunpack.c.l.b16 %v1004
        %v1140 = vunpack.c.l.b16 %v1005
        %v1141 = vunpack.c.l.b16 %v1006
        %v1142 = vunpack.c.l.b16 %v1007
        %v1143 = vunpack.c.l.b16 %v1008
        %v1144 = vunpack.c.l.b16 %v1009
        %v1145 = vunpack.c.l.b16 %v1010
        %v1146 = vunpack.c.l.b16 %v1011
        %v1147 = vunpack.c.l.b16 %v1012
        %v1148 = vunpack.c.l.b16 %v1013
        %v1149 = vunpack.c.l.b16 %v1014
        %v1150 = vunpack.c.l.b16 %v1015
        %v1151 = vunpack.c.l.b16 %v1016
        %v1152 = vunpack.c.l.b16 %v1017
        %v1153 = vunpack.c.l.b16 %v1018
        %v1154 = vunpack.c.l.b16 %v1019
        %v1155 = vunpack.c.l.b16 %v1020
        %v1156 = vunpack.c.l.b16 %v1021
        %v1157 = vunpack.c.l.b16 %v1022
        %v1158 = vunpack.c.l.b16 %v1023
        %v1159 = vunpack.c.l.b16 %v1024
        %v1160 = vunpack.c.l.b16 %v1025
        %v1161 = vunpack.c.l.b16 %v1026
        %v1162 = vunpack.c.l.b16 %v1027
        %v1163 = vunpack.c.l.b16 %v1028
        %v1164 = vunpack.c.l.b16 %v1029
        %v1165 = vunpack.c.l.b16 %v1030
        %v1166 = vunpack.c.l.b16 %v1031
        %v1167 = vunpack.c.l.b16 %v1032
        %v1168 = vunpack.c.l.b16 %v1033
        %v1169 = vunpack.c.l.b16 %v1034
        %v1170 = vunpack.c.l.b16 %v1035
        %v1171 = vunpack.c.l.b16 %v1036
        %v1172 = vunpack.c.l.b16 %v1037
        %v1173 = vpack.c.b16 %v1110, %v1109
        %v1174 = vpack.c.b16 %v1112, %v1111
        %v1175 = vpack.c.b16 %v1114, %v1113
        %v1176 = vpack.c.b16 %v1116, %v1115
        %v1177 = vpack.c.b16 %v1118, %v1117
        %v1178 = vpack.c.b16 %v1120, %v1119
        %v1179 = vpack.c.b16 %v1122, %v1121
        %v1180 = vpack.c.b16 %v1124, %v1123
        %v1181 = vpack.c.b16 %v1126, %v1125
        %v1182 = vpack.c.b16 %v1128, %v1127
        %v1183 = vpack.c.b16 %v1130, %v1129
        %v1184 = vpack.c.b16 %v1132, %v1131
        %v1185 = vpack.c.b16 %v1134, %v1133
        %v1186 = vpack.c.b16 %v1136, %v1135
        %v1187 = vpack.c.b16 %v1138, %v1137
        %v1188 = vpack.c.b16 %v1140, %v1139
        %v1189 = vpack.c.b16 %v1142, %v1141
        %v1190 = vpack.c.b16 %v1144, %v1143
        %v1191 = vpack.c.b16 %v1146, %v1145
        %v1192 = vpack.c.b16 %v1148, %v1147
        %v1193 = vpack.c.b16 %v1150, %v1149
        %v1194 = vpack.c.b16 %v1152, %v1151
        %v1195 = vpack.c.b16 %v1154, %v1153
        %v1196 = vpack.c.b16 %v1156, %v1155
        %v1197 = vpack.c.b16 %v1158, %v1157
        %v1198 = vpack.c.b16 %v1160, %v1159
        %v1199 = vpack.c.b16 %v1162, %v1161
        %v1200 = vpack.c.b16 %v1164, %v1163
        %v1201 = vpack.c.b16 %v1166, %v1165
        %v1202 = vpack.c.b16 %v1168, %v1167
        %v1203 = vpack.c.b16 %v1170, %v1169
        %v1204 = vpack.c.b16 %v1172, %v1171
        %1237 = vmatprep.subr.bf16.mxu0 0
        %1238 = vmatpush1.bf16.msra.mxu0 %v1180
        %1239 = vmatprep.subr.bf16.mxu0 0
        %1240 = vmatpush1.bf16.msra.mxu0 %v1179
        %1241 = vmatprep.subr.bf16.mxu0 0
        %1242 = vmatpush1.bf16.msra.mxu0 %v1178
        %1243 = vmatprep.subr.bf16.mxu0 0
        %1244 = vmatpush1.bf16.msra.mxu0 %v1177
        %1245 = vmatprep.subr.bf16.mxu0 0
        %1246 = vmatpush1.bf16.msra.mxu0 %v1176
        %1247 = vmatprep.subr.bf16.mxu0 0
        %1248 = vmatpush1.bf16.msra.mxu0 %v1175
        %1249 = vmatprep.subr.bf16.mxu0 0
        %1250 = vmatpush1.bf16.msra.mxu0 %v1174
        %1251 = vmatprep.subr.bf16.mxu0 0
        %1252 = vmatpush1.bf16.msra.mxu0 %v1173
        %1253 = vmatprep.subr.bf16.mxu0 0
        %1254 = vmatpush2.bf16.msra.mxu0 %v1188
        %1255 = vmatprep.subr.bf16.mxu0 0
        %1256 = vmatpush2.bf16.msra.mxu0 %v1187
        %1257 = vmatprep.subr.bf16.mxu0 0
        %1258 = vmatpush2.bf16.msra.mxu0 %v1186
        %1259 = vmatprep.subr.bf16.mxu0 0
        %1260 = vmatpush2.bf16.msra.mxu0 %v1185
        %1261 = vmatprep.subr.bf16.mxu0 0
        %1262 = vmatpush2.bf16.msra.mxu0 %v1184
        %1263 = vmatprep.subr.bf16.mxu0 0
        %1264 = vmatpush2.bf16.msra.mxu0 %v1183
        %1265 = vmatprep.subr.bf16.mxu0 0
        %1266 = vmatpush2.bf16.msra.mxu0 %v1182
        %1267 = vmatprep.subr.bf16.mxu0 0
        %1268 = vmatpush2.bf16.msra.mxu0 %v1181
        %1269 = vmatprep.mubr.bf16.mxu0 %v971
        %1270 = vmatmul.mubr.bf16.gmra.mxu0 %v970
        %v1271 = vpop.f32.mrf.mxu0
        %v1272 = vadd.f32 %v1043, %v1271
        %v1273 = vpop.f32.mrf.mxu0
        %v1274 = vpop.f32.mrf.mxu0
        %v1275 = vadd.f32 %v1043, %v1274
        %v1276 = vpop.f32.mrf.mxu0
        %1277 = vdwg.mxu0
        %1278 = vmatprep.subr.bf16.mxu0 0
        %1279 = vmatpush1.bf16.msra.mxu0 %v1196
        %1280 = vmatprep.subr.bf16.mxu0 0
        %1281 = vmatpush1.bf16.msra.mxu0 %v1195
        %1282 = vmatprep.subr.bf16.mxu0 0
        %1283 = vmatpush1.bf16.msra.mxu0 %v1194
        %1284 = vmatprep.subr.bf16.mxu0 0
        %1285 = vmatpush1.bf16.msra.mxu0 %v1193
        %1286 = vmatprep.subr.bf16.mxu0 0
        %1287 = vmatpush1.bf16.msra.mxu0 %v1192
        %1288 = vmatprep.subr.bf16.mxu0 0
        %1289 = vmatpush1.bf16.msra.mxu0 %v1191
        %1290 = vmatprep.subr.bf16.mxu0 0
        %1291 = vmatpush1.bf16.msra.mxu0 %v1190
        %1292 = vmatprep.subr.bf16.mxu0 0
        %1293 = vmatpush1.bf16.msra.mxu0 %v1189
        %1294 = vmatprep.subr.bf16.mxu0 0
        %1295 = vmatpush2.bf16.msra.mxu0 %v1204
        %1296 = vmatprep.subr.bf16.mxu0 0
        %1297 = vmatpush2.bf16.msra.mxu0 %v1203
        %1298 = vmatprep.subr.bf16.mxu0 0
        %1299 = vmatpush2.bf16.msra.mxu0 %v1202
        %1300 = vmatprep.subr.bf16.mxu0 0
        %1301 = vmatpush2.bf16.msra.mxu0 %v1201
        %1302 = vmatprep.subr.bf16.mxu0 0
        %1303 = vmatpush2.bf16.msra.mxu0 %v1200
        %1304 = vmatprep.subr.bf16.mxu0 0
        %1305 = vmatpush2.bf16.msra.mxu0 %v1199
        %1306 = vmatprep.subr.bf16.mxu0 0
        %1307 = vmatpush2.bf16.msra.mxu0 %v1198
        %1308 = vmatprep.subr.bf16.mxu0 0
        %1309 = vmatpush2.bf16.msra.mxu0 %v1197
        %1310 = vmatprep.mubr.bf16.mxu0 %v973
        %1311 = vmatmul.mubr.bf16.gmra.mxu0 %v972
        %v1312 = vpop.f32.mrf.mxu0
        %v1313 = vadd.f32 %v1272, %v1312
        %v1314 = vpop.f32.mrf.mxu0
        %v1315 = vpop.f32.mrf.mxu0
        %v1316 = vadd.f32 %v1275, %v1315
        %v1317 = vpop.f32.mrf.mxu0
        %1318 = vdwg.mxu0
        %1319 = vst [vmem:[%s339] sm:$0xff] %v1313
        %1320 = vst [vmem:[%s339 + $0x8] sm:$0xff] %v1316
        %s1321 = sand.u32 %s186, 1
        %s1322 = scalar_lea.sflag [#allocation4], %s1321
        %s1323 = sand.u32 %s186, 1
        %s1324 = smul.addr %s1323, 16
        %s1325 = scalar_lea.vmem [#allocation10], %s1324
        // Predicated region
        $region65: #{tpu_custom_call.1} parent=47 // pred_check
          %p1326 = pneg %p196
        $region66: #{tpu_custom_call.1} parent=47 // pred_check_branch
          %1328 = sbr.rel (%p1326) target = $region68
        $region67: #{tpu_custom_call.1} parent=47 // pred_region
          %s1329 = smul.u32 2, %s26
          %s1331 = ssub.s32 256, 256
          %1332 = vsyncadd %s1322, %s1331
          %s1333 = smul.addr %s1329, 128
          %s1334 = scalar_lea.hbm %s7, %s1333
          %s1335 = sshll.u32 %s1325, 4
          %s1336 = int_to_ptr.vmem [resolvable:$true] %s1335
          %1341 = dma.vmem_to_hbm [thread:$0]  %s1336, 256, %s1334, %s1322, 128, 128, 8
        $region68: #{tpu_custom_call.1} parent=47 // pred_fallthru
          _
      $region48: #{tpu_custom_call.1} parent=5 // pred_fallthru
        _
      %p1342 = scmp.le.s32.totalorder 2, %s21
      // Predicated region
      $region69: #{tpu_custom_call.1} parent=5 // pred_check
        %p1343 = pneg %p1342
      $region70: #{tpu_custom_call.1} parent=5 // pred_check_branch
        %1345 = sbr.rel (%p1343) target = $region72
      $region71: #{tpu_custom_call.1} parent=5 // pred_region
        %s1346 = ssub.s32 %s21, 2
        // Predicated region
        $region73: #{tpu_custom_call.1} parent=71 // pred_check
          %p1347 = pneg %p202
        $region74: #{tpu_custom_call.1} parent=71 // pred_check_branch
          %1349 = sbr.rel (%p1347) target = $region76
        $region75: #{tpu_custom_call.1} parent=71 // pred_region
          %s1350 = sand.u32 %s187, 1
          %s1351 = scalar_lea.sflag [#allocation4], %s1350
          %s1352 = sand.u32 %s187, 1
          %s1353 = smul.addr %s1352, 16
          %s1354 = scalar_lea.vmem [#allocation10], %s1353
          %1355 = dma.done %s1351, 256
        $region76: #{tpu_custom_call.1} parent=71 // pred_fallthru
          _
      $region72: #{tpu_custom_call.1} parent=5 // pred_fallthru
        _
    $region6: #{tpu_custom_call.1} parent=1 // loop_footer
      %s25 = sadd.s32 1, %s21
    $region7: #{tpu_custom_call.1} parent=1 // loop_footer_branch
      %20 = sbr.rel target = $region3
    $region8: #{tpu_custom_call.1} parent=1 // loop_exit
      _
    %1356 = vsyncpa [#allocation3], 1
    %s1357 = scalar_lea.sflag [#allocation3], 1
    %1358 = vsyncpa %s1357, 1
    %1359 = vsyncpa [#allocation6], 1
    %1360 = vsyncpa [#allocation9], 1
    %1361 = vsyncpa [#allocation4], 1
    %s1362 = scalar_lea.sflag [#allocation4], 1
    %1363 = vsyncpa %s1362, 1

</llo_original>
